<compile_context>
chip_gen: v7x
topology: tpu7x:2x2x1
jax: 0.10.0
libtpu: 0.0.40
codegen_flags: <defaults>
</compile_context>

<pallas_src>
import jax
import jax.numpy as jnp
from jax.experimental import pallas as pl
from jax.experimental.pallas import tpu as pltpu


def _round_up(x, m):
    return (x + m - 1) // m * m


def _dual_model_kernel(x_ref, w1_ref, b1_ref, w3_ref, b3_ref, o_ref):
    """relu(relu(x @ W1 + b1) @ W3 + b3) for one batch tile (bf16 MXU, f32 acc)."""
    # fc1 + ReLU
    h = jnp.dot(x_ref[...], w1_ref[...], preferred_element_type=jnp.float32)
    h = jnp.maximum(h + b1_ref[...], 0.0)
    # fc3 + ReLU (re-enter the MXU in bf16, accumulate in f32)
    out = jnp.dot(h.astype(jnp.bfloat16), w3_ref[...],
                  preferred_element_type=jnp.float32)
    out = jnp.maximum(out + b3_ref[...], 0.0)
    o_ref[...] = out.astype(o_ref.dtype)


def dual_model_forward(x, params, *, block_batch=256):
    """x: (B, input_size) float32.  params: [(W1, b1), (W3, b3)], W as (in, out)."""
    (w1, b1), (w3, b3) = params
    B, D_in = x.shape
    H = w1.shape[1]
    D_out = w3.shape[1]

    # Lane-dense padding of feature dims (multiples of 128).
    D_in_p = _round_up(D_in, 128)
    H_p = _round_up(H, 128)
    D_out_p = _round_up(D_out, 128)

    # Batch tile: multiples of 128, capped at block_batch; pad batch to a tile.
    bb = min(_round_up(block_batch, 128), _round_up(B, 128))
    B_p = _round_up(B, bb)
    grid = (B_p // bb,)

    # Zero-padded, bf16 matmul operands (padded rows/cols contribute exactly 0,
    # and relu(0 + 0) = 0 in the padded output lanes, which are sliced off).
    x_p = jnp.zeros((B_p, D_in_p), jnp.bfloat16).at[:B, :D_in].set(
        x.astype(jnp.bfloat16))
    w1_p = jnp.zeros((D_in_p, H_p), jnp.bfloat16).at[:D_in, :H].set(
        w1.astype(jnp.bfloat16))
    b1_p = jnp.zeros((1, H_p), jnp.float32).at[:, :H].set(b1.astype(jnp.float32))
    w3_p = jnp.zeros((H_p, D_out_p), jnp.bfloat16).at[:H, :D_out].set(
        w3.astype(jnp.bfloat16))
    b3_p = jnp.zeros((1, D_out_p), jnp.float32).at[:, :D_out].set(
        b3.astype(jnp.float32))

    cost = pl.CostEstimate(
        flops=2 * B_p * (D_in_p * H_p + H_p * D_out_p),
        transcendentals=0,
        bytes_accessed=(x_p.size * 2 + w1_p.size * 2 + w3_p.size * 2
                        + b1_p.size * 4 + b3_p.size * 4 + B_p * D_out_p * 4),
    )

    out_p = pl.pallas_call(
        _dual_model_kernel,
        out_shape=jax.ShapeDtypeStruct((B_p, D_out_p), jnp.float32),
        grid_spec=pltpu.PrefetchScalarGridSpec(
            num_scalar_prefetch=0,
            grid=grid,
            in_specs=[
                pl.BlockSpec((bb, D_in_p), lambda i: (i, 0)),      # x tile
                pl.BlockSpec((D_in_p, H_p), lambda i: (0, 0)),     # W1 (resident)
                pl.BlockSpec((1, H_p), lambda i: (0, 0)),          # b1
                pl.BlockSpec((H_p, D_out_p), lambda i: (0, 0)),    # W3 (resident)
                pl.BlockSpec((1, D_out_p), lambda i: (0, 0)),      # b3
            ],
            out_specs=pl.BlockSpec((bb, D_out_p), lambda i: (i, 0)),
        ),
        compiler_params=pltpu.CompilerParams(
            dimension_semantics=("parallel",),
            vmem_limit_bytes=64 * 1024 * 1024,
        ),
        cost_estimate=cost,
    )(x_p, w1_p, b1_p, w3_p, b3_p)

    return out_p[:B, :D_out]


def init_dual_model_params(key, input_size, output_size=1):
    """Match the PyTorch module: weights ~ N(0, 1) (nn.init.normal_),
    biases keep nn.Linear's default U(-1/sqrt(fan_in), 1/sqrt(fan_in))."""
    dims = [(input_size, 128), (128, output_size)]
    params = []
    for fan_in, fan_out in dims:
        key, kw, kb = jax.random.split(key, 3)
        w = jax.random.normal(kw, (fan_in, fan_out), jnp.float32)
        bound = 1.0 / jnp.sqrt(jnp.float32(fan_in))
        b = jax.random.uniform(kb, (1, fan_out), jnp.float32,
                               minval=-bound, maxval=bound)
        params.append((w, b))
    return params


def reference_forward(x, params):
    """Pure-JAX reference using the same bf16-rounded matmul inputs as the kernel."""
    (w1, b1), (w3, b3) = params
    xf = x.astype(jnp.bfloat16).astype(jnp.float32)
    w1f = w1.astype(jnp.bfloat16).astype(jnp.float32)
    w3f = w3.astype(jnp.bfloat16).astype(jnp.float32)
    h = jnp.maximum(xf @ w1f + b1, 0.0)
    hf = h.astype(jnp.bfloat16).astype(jnp.float32)
    return jnp.maximum(hf @ w3f + b3, 0.0)


if __name__ == "__main__":
    INPUT_SIZE = 64     # padded to 128 lanes inside the wrapper
    OUTPUT_SIZE = 1     # padded to 128 lanes inside the wrapper
    BATCH = 512         # 2 grid steps of 256 rows -> both v7x TCs get work

    key = jax.random.PRNGKey(0)
    key, kx = jax.random.split(key)
    x = jax.random.normal(kx, (BATCH, INPUT_SIZE), jnp.float32)

    params = init_dual_model_params(jax.random.PRNGKey(0), INPUT_SIZE, OUTPUT_SIZE)

    out = dual_model_forward(x, params, block_batch=256)
    out = jax.block_until_ready(out)

    ref = reference_forward(x, params)
    assert out.shape == (BATCH, OUTPUT_SIZE), out.shape
    assert jnp.allclose(out, ref, atol=1e-2, rtol=1e-2), "mismatch vs reference"

    print("KERNEL_OK")
</pallas_src>

<mosaic_0001>
module attributes {stable_mosaic.version = 11 : i64} {
  func.func @_dual_model_kernel(%arg0: i32, %arg1: memref<256x128xbf16, #tpu.memory_space<vmem>>, %arg2: memref<128x128xbf16, #tpu.memory_space<vmem>>, %arg3: memref<1x128xf32, #tpu.memory_space<vmem>>, %arg4: memref<128x128xbf16, #tpu.memory_space<vmem>>, %arg5: memref<1x128xf32, #tpu.memory_space<vmem>>, %arg6: memref<256x128xf32, #tpu.memory_space<vmem>>) attributes {dimension_semantics = [#tpu.dimension_semantics<parallel>], iteration_bounds = array<i64: 2>, scalar_prefetch = 0 : i64, scratch_operands = 0 : i64, tpu.core_type = #tpu.core_type<tc>, window_params = [{transform_indices = @transform_0, window_bounds = array<i64: 256, 128>}, {pipeline_mode = #tpu.pipeline_mode<synchronous>, transform_indices = @transform_1, window_bounds = array<i64: 128, 128>}, {pipeline_mode = #tpu.pipeline_mode<synchronous>, transform_indices = @transform_2, window_bounds = array<i64: 1, 128>}, {pipeline_mode = #tpu.pipeline_mode<synchronous>, transform_indices = @transform_3, window_bounds = array<i64: 128, 128>}, {pipeline_mode = #tpu.pipeline_mode<synchronous>, transform_indices = @transform_4, window_bounds = array<i64: 1, 128>}, {transform_indices = @transform_5, window_bounds = array<i64: 256, 128>}]} {
    %c0 = arith.constant 0 : index
    %c0_0 = arith.constant 0 : index
    %0 = vector.load %arg1[%c0, %c0_0] : memref<256x128xbf16, #tpu.memory_space<vmem>>, vector<256x128xbf16>
    %c0_1 = arith.constant 0 : index
    %c0_2 = arith.constant 0 : index
    %1 = vector.load %arg2[%c0_1, %c0_2] : memref<128x128xbf16, #tpu.memory_space<vmem>>, vector<128x128xbf16>
    %cst = arith.constant dense<0.000000e+00> : vector<256x128xf32>
    %2 = tpu.matmul %0, %1, %cst {dimension_numbers = #tpu.dot_dimension_numbers<[1], [0], [0], [1], [0, 0, 1, 1], [], []>} : vector<256x128xbf16>, vector<128x128xbf16>, vector<256x128xf32> -> vector<256x128xf32>
    %c0_3 = arith.constant 0 : index
    %c0_4 = arith.constant 0 : index
    %3 = vector.load %arg3[%c0_3, %c0_4] : memref<1x128xf32, #tpu.memory_space<vmem>>, vector<1x128xf32>
    %4 = vector.broadcast %3 : vector<1x128xf32> to vector<256x128xf32>
    %5 = arith.addf %2, %4 : vector<256x128xf32>
    %cst_5 = arith.constant 0.000000e+00 : f32
    %6 = vector.broadcast %cst_5 : f32 to vector<256x128xf32>
    %7 = arith.maximumf %5, %6 : vector<256x128xf32>
    %8 = arith.truncf %7 : vector<256x128xf32> to vector<256x128xbf16>
    %c0_6 = arith.constant 0 : index
    %c0_7 = arith.constant 0 : index
    %9 = vector.load %arg4[%c0_6, %c0_7] : memref<128x128xbf16, #tpu.memory_space<vmem>>, vector<128x128xbf16>
    %cst_8 = arith.constant dense<0.000000e+00> : vector<256x128xf32>
    %10 = tpu.matmul %8, %9, %cst_8 {dimension_numbers = #tpu.dot_dimension_numbers<[1], [0], [0], [1], [0, 0, 1, 1], [], []>} : vector<256x128xbf16>, vector<128x128xbf16>, vector<256x128xf32> -> vector<256x128xf32>
    %c0_9 = arith.constant 0 : index
    %c0_10 = arith.constant 0 : index
    %11 = vector.load %arg5[%c0_9, %c0_10] : memref<1x128xf32, #tpu.memory_space<vmem>>, vector<1x128xf32>
    %12 = vector.broadcast %11 : vector<1x128xf32> to vector<256x128xf32>
    %13 = arith.addf %10, %12 : vector<256x128xf32>
    %cst_11 = arith.constant 0.000000e+00 : f32
    %14 = vector.broadcast %cst_11 : f32 to vector<256x128xf32>
    %15 = arith.maximumf %13, %14 : vector<256x128xf32>
    %c0_12 = arith.constant 0 : index
    %c0_13 = arith.constant 0 : index
    %16 = vector.load %arg6[%c0_12, %c0_13] : memref<256x128xf32, #tpu.memory_space<vmem>>, vector<256x128xf32>
    tpu.vector_store %arg6[%c0_12, %c0_13], %15 {strides = array<i32>} : memref<256x128xf32, #tpu.memory_space<vmem>>, vector<256x128xf32>,
    return
  }
  func.func @transform_0(%arg0: i32) -> (i32, i32) {
    %c0_i32 = arith.constant 0 : i32
    %c0_i32_0 = arith.constant 0 : i32
    return %arg0, %c0_i32 : i32, i32
  }
  func.func @transform_1(%arg0: i32) -> (i32, i32) {
    %c0_i32 = arith.constant 0 : i32
    %c0_i32_0 = arith.constant 0 : i32
    %c0_i32_1 = arith.constant 0 : i32
    return %c0_i32, %c0_i32_0 : i32, i32
  }
  func.func @transform_2(%arg0: i32) -> (i32, i32) {
    %c0_i32 = arith.constant 0 : i32
    %c0_i32_0 = arith.constant 0 : i32
    %c0_i32_1 = arith.constant 0 : i32
    return %c0_i32, %c0_i32_0 : i32, i32
  }
  func.func @transform_3(%arg0: i32) -> (i32, i32) {
    %c0_i32 = arith.constant 0 : i32
    %c0_i32_0 = arith.constant 0 : i32
    %c0_i32_1 = arith.constant 0 : i32
    return %c0_i32, %c0_i32_0 : i32, i32
  }
  func.func @transform_4(%arg0: i32) -> (i32, i32) {
    %c0_i32 = arith.constant 0 : i32
    %c0_i32_0 = arith.constant 0 : i32
    %c0_i32_1 = arith.constant 0 : i32
    return %c0_i32, %c0_i32_0 : i32, i32
  }
  func.func @transform_5(%arg0: i32) -> (i32, i32) {
    %c0_i32 = arith.constant 0 : i32
    %c0_i32_0 = arith.constant 0 : i32
    return %arg0, %c0_i32 : i32, i32
  }
}

</mosaic_0001>

<llo_original>
// kernel: tpu_custom_call.1
$region0: #{tpu_custom_call.1}
  #allocation0 [shape = 'u32[]', space=smem, size = 0x4, offset = 0x4, fixed_abs, tag = 'smem constant byte address 0x4 - core index']
  #allocation1 [shape = 'u32[144,128]{1,0:T(1,128)}', space=vmem, size = 0x12000, scoped, tag = 'internal scratch']
  %s0 = inlined_call_operand.hbm [shape: bf16[512,128], index: 0, kind: input, shape index: {}]
  %s1 = inlined_call_operand.hbm [shape: bf16[128,128], index: 1, kind: input, shape index: {}]
  %s2 = inlined_call_operand.hbm [shape: f32[1,128], index: 2, kind: input, shape index: {}]
  %s3 = inlined_call_operand.hbm [shape: bf16[128,128], index: 3, kind: input, shape index: {}]
  %s4 = inlined_call_operand.hbm [shape: f32[1,128], index: 4, kind: input, shape index: {}]
  %s5 = inlined_call_operand.hbm [shape: f32[512,128], index: 5, kind: output, shape index: {}]
  %s6 = sld [smem:[#allocation0]]
  $region73: #{tpu_custom_call.1} parent=0
    _
  %s8 = ssub.s32 1, %s6
  %s9 = scalar_select 0, %s8, %s6
  $region1: #{tpu_custom_call.1} parent=0
    #allocation2 [shape = 'u8[131072]{0}', space=vmem, size = 0x20000, scoped, tag = 'input window, operand 0']
    #allocation3 [shape = 's32[2]{0}', space=sflag, size = 0x8, scoped, tag = 'scoped memory for tpu_custom_call.1']
    #allocation4 [shape = 's32[2]{0}', space=sflag, size = 0x8, scoped, tag = 'scoped memory for tpu_custom_call.1']
    #allocation5 [shape = 'u8[32768]{0}', space=vmem, size = 0x8000, scoped, tag = 'input window, operand 1, single buffered']
    #allocation6 [shape = 's32[1]{0}', space=sflag, size = 0x4, scoped, tag = 'scoped memory for tpu_custom_call.1']
    #allocation7 [shape = 'u8[512]{0}', space=vmem, size = 0x400, scoped, tag = 'input window, operand 2, single buffered']
    #allocation8 [shape = 'u8[32768]{0}', space=vmem, size = 0x8000, scoped, tag = 'input window, operand 3, single buffered']
    #allocation9 [shape = 's32[1]{0}', space=sflag, size = 0x4, scoped, tag = 'scoped memory for tpu_custom_call.1']
    #allocation10 [shape = 'u8[512]{0}', space=vmem, size = 0x400, scoped, tag = 'input window, operand 4, single buffered']
    #allocation11 [shape = 'u8[262144]{0}', space=vmem, size = 0x40000, scoped, tag = 'output window, operand 0']
    %10 = vsyncpa [#allocation3], 0
    %s11 = scalar_lea.sflag [#allocation3], 1
    %12 = vsyncpa %s11, 0
    %13 = vsyncpa [#allocation6], 0
    %14 = vsyncpa [#allocation9], 0
    %15 = vsyncpa [#allocation4], 0
    %s16 = scalar_lea.sflag [#allocation4], 1
    %17 = vsyncpa %s16, 0
    loop: start=0, step=1, limit=4
    $region2: #{tpu_custom_call.1} parent=1 // loop_pre_header
      _
    $region3: #{tpu_custom_call.1} parent=1 // loop_header
      %s19 = sphi 0, %s23
      %p20 = scmp.ge.s32.totalorder %s19, 4
      %s29 = sphi 0, %s31
      %s32 = sphi 0, %s29
      %s33 = sphi 0, %s32
      %s49 = sphi 0, %s33
      %s53 = sphi 0, %s53
      %s55 = sphi 0, %s53
      %s56 = sphi 0, %s55
      %s70 = sphi 0, %s56
      %s74 = sphi 0, %s74
      %s76 = sphi 0, %s74
      %s77 = sphi 0, %s76
      %s91 = sphi 0, %s77
      %s95 = sphi 0, %s95
      %s97 = sphi 0, %s95
      %s98 = sphi 0, %s97
      %s112 = sphi 0, %s98
      %s116 = sphi 0, %s116
      %s118 = sphi 0, %s116
      %s119 = sphi 0, %s118
      %s133 = sphi 0, %s119
      %s139 = sphi 0, %s141
      %s142 = sphi 0, %s139
      %s143 = sphi 0, %s142
      %s159 = sphi 0, %s143
    $region4: #{tpu_custom_call.1} parent=1 // loop_header_branch
      %22 = sbr.rel (%p20) target = $region8
    $region5: #{tpu_custom_call.1} parent=1 // loop_body
      %s24 = ssub.s32 %s19, 1
      %s25 = ssub.s32 %s19, 2
      %s26 = sadd.s32 %s19, 1
      %s27 = ssub.s32 %s19, %s26
      %p28 = scmp.eq.s32.totalorder %s27, 0
      %s30 = sadd.s32 %s29, 1
      %s31 = scalar_select %p28, %s29, %s30
      %p34 = pneg %p28
      %p35 = scmp.eq.s32.totalorder %s19, 1
      %p36 = por %p34, %p35
      %p37 = scmp.ne.s32.totalorder %s29, %s32
      %p38 = scmp.eq.s32.totalorder %s19, 0
      %p39 = por %p37, %p38
      %p40 = scmp.ne.s32.totalorder %s29, %s32
      %p41 = scmp.eq.s32.totalorder %s24, 1
      %p42 = por %p40, %p41
      %p43 = scmp.ne.s32.totalorder %s32, %s33
      %p44 = scmp.eq.s32.totalorder %s24, 0
      %p45 = por %p43, %p44
      %p46 = scmp.ne.s32.totalorder %s32, %s33
      %p47 = scmp.eq.s32.totalorder %s25, 1
      %p48 = por %p46, %p47
      %p50 = scmp.ne.s32.totalorder %s33, %s49
      %p51 = scmp.eq.s32.totalorder %s25, 0
      %p52 = por %p50, %p51
      %s54 = sadd.s32 %s53, 1
      %p57 = scmp.eq.s32.totalorder %s19, 1
      %p58 = scmp.ne.s32.totalorder %s53, %s55
      %p59 = scmp.eq.s32.totalorder %s19, 0
      %p60 = por %p58, %p59
      %p61 = scmp.ne.s32.totalorder %s53, %s55
      %p62 = scmp.eq.s32.totalorder %s24, 1
      %p63 = por %p61, %p62
      %p64 = scmp.ne.s32.totalorder %s55, %s56
      %p65 = scmp.eq.s32.totalorder %s24, 0
      %p66 = por %p64, %p65
      %p67 = scmp.ne.s32.totalorder %s55, %s56
      %p68 = scmp.eq.s32.totalorder %s25, 1
      %p69 = por %p67, %p68
      %p71 = scmp.ne.s32.totalorder %s56, %s70
      %p72 = scmp.eq.s32.totalorder %s25, 0
      %p73 = por %p71, %p72
      %s75 = sadd.s32 %s74, 1
      %p78 = scmp.eq.s32.totalorder %s19, 1
      %p79 = scmp.ne.s32.totalorder %s74, %s76
      %p80 = scmp.eq.s32.totalorder %s19, 0
      %p81 = por %p79, %p80
      %p82 = scmp.ne.s32.totalorder %s74, %s76
      %p83 = scmp.eq.s32.totalorder %s24, 1
      %p84 = por %p82, %p83
      %p85 = scmp.ne.s32.totalorder %s76, %s77
      %p86 = scmp.eq.s32.totalorder %s24, 0
      %p87 = por %p85, %p86
      %p88 = scmp.ne.s32.totalorder %s76, %s77
      %p89 = scmp.eq.s32.totalorder %s25, 1
      %p90 = por %p88, %p89
      %p92 = scmp.ne.s32.totalorder %s77, %s91
      %p93 = scmp.eq.s32.totalorder %s25, 0
      %p94 = por %p92, %p93
      %s96 = sadd.s32 %s95, 1
      %p99 = scmp.eq.s32.totalorder %s19, 1
      %p100 = scmp.ne.s32.totalorder %s95, %s97
      %p101 = scmp.eq.s32.totalorder %s19, 0
      %p102 = por %p100, %p101
      %p103 = scmp.ne.s32.totalorder %s95, %s97
      %p104 = scmp.eq.s32.totalorder %s24, 1
      %p105 = por %p103, %p104
      %p106 = scmp.ne.s32.totalorder %s97, %s98
      %p107 = scmp.eq.s32.totalorder %s24, 0
      %p108 = por %p106, %p107
      %p109 = scmp.ne.s32.totalorder %s97, %s98
      %p110 = scmp.eq.s32.totalorder %s25, 1
      %p111 = por %p109, %p110
      %p113 = scmp.ne.s32.totalorder %s98, %s112
      %p114 = scmp.eq.s32.totalorder %s25, 0
      %p115 = por %p113, %p114
      %s117 = sadd.s32 %s116, 1
      %p120 = scmp.eq.s32.totalorder %s19, 1
      %p121 = scmp.ne.s32.totalorder %s116, %s118
      %p122 = scmp.eq.s32.totalorder %s19, 0
      %p123 = por %p121, %p122
      %p124 = scmp.ne.s32.totalorder %s116, %s118
      %p125 = scmp.eq.s32.totalorder %s24, 1
      %p126 = por %p124, %p125
      %p127 = scmp.ne.s32.totalorder %s118, %s119
      %p128 = scmp.eq.s32.totalorder %s24, 0
      %p129 = por %p127, %p128
      %p130 = scmp.ne.s32.totalorder %s118, %s119
      %p131 = scmp.eq.s32.totalorder %s25, 1
      %p132 = por %p130, %p131
      %p134 = scmp.ne.s32.totalorder %s119, %s133
      %p135 = scmp.eq.s32.totalorder %s25, 0
      %p136 = por %p134, %p135
      %s137 = ssub.s32 %s19, %s26
      %p138 = scmp.eq.s32.totalorder %s137, 0
      %s140 = sadd.s32 %s139, 1
      %s141 = scalar_select %p138, %s139, %s140
      %p144 = pneg %p138
      %p145 = scmp.eq.s32.totalorder %s19, 1
      %p146 = por %p144, %p145
      %p147 = scmp.ne.s32.totalorder %s139, %s142
      %p148 = scmp.eq.s32.totalorder %s19, 0
      %p149 = por %p147, %p148
      %p150 = scmp.ne.s32.totalorder %s139, %s142
      %p151 = scmp.eq.s32.totalorder %s24, 1
      %p152 = por %p150, %p151
      %p153 = scmp.ne.s32.totalorder %s142, %s143
      %p154 = scmp.eq.s32.totalorder %s24, 0
      %p155 = por %p153, %p154
      %p156 = scmp.ne.s32.totalorder %s142, %s143
      %p157 = scmp.eq.s32.totalorder %s25, 1
      %p158 = por %p156, %p157
      %p160 = scmp.ne.s32.totalorder %s143, %s159
      %p161 = scmp.eq.s32.totalorder %s25, 0
      %p162 = por %p160, %p161
      %p163 = scmp.le.s32.totalorder 1, %s19
      %p164 = scmp.lt.s32.totalorder %s19, 3
      %p165 = pnand %p163, %p164
      %p166 = pneg %p165
      // Predicated region
      $region9: #{tpu_custom_call.1} parent=5 // pred_check
        _
      $region10: #{tpu_custom_call.1} parent=5 // pred_check_branch
        %168 = sbr.rel (%p165) target = $region12
      $region11: #{tpu_custom_call.1} parent=5 // pred_region
        %s169 = ssub.s32 %s19, 1
        // Predicated region
        $region13: #{tpu_custom_call.1} parent=11 // pred_check
          %p170 = pneg %p66
        $region14: #{tpu_custom_call.1} parent=11 // pred_check_branch
          %172 = sbr.rel (%p170) target = $region16
        $region15: #{tpu_custom_call.1} parent=11 // pred_region
          %s174 = ssub.s32 1024, 1024
          %175 = vsyncadd [#allocation6], %s174
          %s176 = sshll.u32 [#allocation5], 4
          %s177 = int_to_ptr.vmem [resolvable:$true] %s176
          %182 = dma.hbm_to_vmem [thread:$0]  %s1, 1024, %s177, [#allocation6], 64, 64, 4
        $region16: #{tpu_custom_call.1} parent=11 // pred_fallthru
          _
        // Predicated region
        $region17: #{tpu_custom_call.1} parent=11 // pred_check
          %p183 = pneg %p87
        $region18: #{tpu_custom_call.1} parent=11 // pred_check_branch
          %185 = sbr.rel (%p183) target = $region20
        $region19: #{tpu_custom_call.1} parent=11 // pred_region
          %s187 = ssub.s32 16, 16
          %188 = vsyncadd [#allocation6], %s187
          %s190 = sshll.u32 [#allocation7], 4
          %s191 = int_to_ptr.vmem [resolvable:$true] %s190
          %193 = dma.hbm_to_vmem [thread:$0]  %s2, 16, %s191, [#allocation6]
        $region20: #{tpu_custom_call.1} parent=11 // pred_fallthru
          _
        // Predicated region
        $region21: #{tpu_custom_call.1} parent=11 // pred_check
          %p194 = pneg %p108
        $region22: #{tpu_custom_call.1} parent=11 // pred_check_branch
          %196 = sbr.rel (%p194) target = $region24
        $region23: #{tpu_custom_call.1} parent=11 // pred_region
          %s198 = ssub.s32 1024, 1024
          %199 = vsyncadd [#allocation9], %s198
          %s200 = sshll.u32 [#allocation8], 4
          %s201 = int_to_ptr.vmem [resolvable:$true] %s200
          %206 = dma.hbm_to_vmem [thread:$0]  %s3, 1024, %s201, [#allocation9], 64, 64, 4
        $region24: #{tpu_custom_call.1} parent=11 // pred_fallthru
          _
        // Predicated region
        $region25: #{tpu_custom_call.1} parent=11 // pred_check
          %p207 = pneg %p129
        $region26: #{tpu_custom_call.1} parent=11 // pred_check_branch
          %209 = sbr.rel (%p207) target = $region28
        $region27: #{tpu_custom_call.1} parent=11 // pred_region
          %s211 = ssub.s32 16, 16
          %212 = vsyncadd [#allocation9], %s211
          %s214 = sshll.u32 [#allocation10], 4
          %s215 = int_to_ptr.vmem [resolvable:$true] %s214
          %217 = dma.hbm_to_vmem [thread:$0]  %s4, 16, %s215, [#allocation9]
        $region28: #{tpu_custom_call.1} parent=11 // pred_fallthru
          _
      $region12: #{tpu_custom_call.1} parent=5 // pred_fallthru
        _
      %p218 = scmp.lt.s32.totalorder %s19, 2
      // Predicated region
      $region29: #{tpu_custom_call.1} parent=5 // pred_check
        %p219 = pneg %p218
      $region30: #{tpu_custom_call.1} parent=5 // pred_check_branch
        %221 = sbr.rel (%p219) target = $region32
      $region31: #{tpu_custom_call.1} parent=5 // pred_region
        // Predicated region
        $region33: #{tpu_custom_call.1} parent=31 // pred_check
          %p222 = pneg %p39
        $region34: #{tpu_custom_call.1} parent=31 // pred_check_branch
          %224 = sbr.rel (%p222) target = $region36
        $region35: #{tpu_custom_call.1} parent=31 // pred_region
          %s225 = sand.u32 %s29, 1
          %s226 = scalar_lea.sflag [#allocation3], %s225
          %s227 = sand.u32 %s29, 1
          %s228 = smul.addr %s227, 128
          %s229 = scalar_lea.vmem [#allocation2], %s228
          %s230 = smul.u32 32, %s19
          %s232 = ssub.s32 2048, 2048
          %233 = vsyncadd %s226, %s232
          %s234 = smul.addr %s230, 64
          %s235 = scalar_lea.hbm %s0, %s234
          %s236 = sshll.u32 %s229, 4
          %s237 = int_to_ptr.vmem [resolvable:$true] %s236
          %242 = dma.hbm_to_vmem [thread:$0]  %s235, 2048, %s237, %s226, 64, 64, 4
        $region36: #{tpu_custom_call.1} parent=31 // pred_fallthru
          _
      $region32: #{tpu_custom_call.1} parent=5 // pred_fallthru
        _
      %p243 = scmp.le.s32.totalorder 1, %s19
      %p244 = scmp.lt.s32.totalorder %s19, 3
      %p245 = pnand %p243, %p244
      %p246 = pneg %p245
      // Predicated region
      $region37: #{tpu_custom_call.1} parent=5 // pred_check
        _
      $region38: #{tpu_custom_call.1} parent=5 // pred_check_branch
        %248 = sbr.rel (%p245) target = $region40
      $region39: #{tpu_custom_call.1} parent=5 // pred_region
        %s249 = ssub.s32 %s19, 1
        %s250 = sand.u32 %s32, 1
        %s251 = scalar_lea.sflag [#allocation3], %s250
        %s252 = sand.u32 %s32, 1
        %s253 = smul.addr %s252, 128
        %s254 = scalar_lea.vmem [#allocation2], %s253
        // Predicated region
        $region41: #{tpu_custom_call.1} parent=39 // pred_check
          %p255 = pneg %p45
        $region42: #{tpu_custom_call.1} parent=39 // pred_check_branch
          %257 = sbr.rel (%p255) target = $region44
        $region43: #{tpu_custom_call.1} parent=39 // pred_region
          %258 = dma.done %s251, 2048
        $region44: #{tpu_custom_call.1} parent=39 // pred_fallthru
          _
        // Predicated region
        $region45: #{tpu_custom_call.1} parent=39 // pred_check
          %p259 = pneg %p66
        $region46: #{tpu_custom_call.1} parent=39 // pred_check_branch
          %261 = sbr.rel (%p259) target = $region48
        $region47: #{tpu_custom_call.1} parent=39 // pred_region
          %262 = dma.done [#allocation6], 1024
        $region48: #{tpu_custom_call.1} parent=39 // pred_fallthru
          _
        // Predicated region
        $region49: #{tpu_custom_call.1} parent=39 // pred_check
          %p263 = pneg %p87
        $region50: #{tpu_custom_call.1} parent=39 // pred_check_branch
          %265 = sbr.rel (%p263) target = $region52
        $region51: #{tpu_custom_call.1} parent=39 // pred_region
          %266 = dma.done [#allocation6], 16
        $region52: #{tpu_custom_call.1} parent=39 // pred_fallthru
          _
        // Predicated region
        $region53: #{tpu_custom_call.1} parent=39 // pred_check
          %p267 = pneg %p108
        $region54: #{tpu_custom_call.1} parent=39 // pred_check_branch
          %269 = sbr.rel (%p267) target = $region56
        $region55: #{tpu_custom_call.1} parent=39 // pred_region
          %270 = dma.done [#allocation9], 1024
        $region56: #{tpu_custom_call.1} parent=39 // pred_fallthru
          _
        // Predicated region
        $region57: #{tpu_custom_call.1} parent=39 // pred_check
          %p271 = pneg %p129
        $region58: #{tpu_custom_call.1} parent=39 // pred_check_branch
          %273 = sbr.rel (%p271) target = $region60
        $region59: #{tpu_custom_call.1} parent=39 // pred_region
          %274 = dma.done [#allocation9], 16
        $region60: #{tpu_custom_call.1} parent=39 // pred_fallthru
          _
        %s275 = sand.u32 %s32, 1
        %s276 = scalar_lea.sflag [#allocation3], %s275
        %s277 = sand.u32 %s32, 1
        %s278 = smul.addr %s277, 128
        %s279 = scalar_lea.vmem [#allocation2], %s278
        %p280 = pneg %p45
        %p281 = pneg %p42
        %p282 = pneg %p66
        %p283 = pneg %p63
        %p284 = pneg %p87
        %p285 = pneg %p84
        %p286 = pneg %p108
        %p287 = pneg %p105
        %p288 = pneg %p129
        %p289 = pneg %p126
        %p290 = pneg %p155
        %p291 = pneg %p152
        %s292 = sand.u32 %s142, 1
        %s293 = scalar_lea.sflag [#allocation4], %s292
        %s294 = sand.u32 %s142, 1
        %s295 = smul.addr %s294, 256
        %s296 = scalar_lea.vmem [#allocation11], %s295
        %s297 = smul.u32 32, %s24
        %s298 = smul.u32 32, %s24
        %v300 = vld [vmem:[%s254] sm:$0xf]
        %v301 = vld [vmem:[%s254 + $0x4] sm:$0xf]
        %v302 = vld [vmem:[%s254 + $0x8] sm:$0xf]
        %v303 = vld [vmem:[%s254 + $0xc] sm:$0xf]
        %v304 = vld [vmem:[%s254 + $0x10] sm:$0xf]
        %v305 = vld [vmem:[%s254 + $0x14] sm:$0xf]
        %v306 = vld [vmem:[%s254 + $0x18] sm:$0xf]
        %v307 = vld [vmem:[%s254 + $0x1c] sm:$0xf]
        %v308 = vld [vmem:[%s254 + $0x20] sm:$0xf]
        %v309 = vld [vmem:[%s254 + $0x24] sm:$0xf]
        %v310 = vld [vmem:[%s254 + $0x28] sm:$0xf]
        %v311 = vld [vmem:[%s254 + $0x2c] sm:$0xf]
        %v312 = vld [vmem:[%s254 + $0x30] sm:$0xf]
        %v313 = vld [vmem:[%s254 + $0x34] sm:$0xf]
        %v314 = vld [vmem:[%s254 + $0x38] sm:$0xf]
        %v315 = vld [vmem:[%s254 + $0x3c] sm:$0xf]
        %v316 = vld [vmem:[%s254 + $0x40] sm:$0xf]
        %v317 = vld [vmem:[%s254 + $0x44] sm:$0xf]
        %v318 = vld [vmem:[%s254 + $0x48] sm:$0xf]
        %v319 = vld [vmem:[%s254 + $0x4c] sm:$0xf]
        %v320 = vld [vmem:[%s254 + $0x50] sm:$0xf]
        %v321 = vld [vmem:[%s254 + $0x54] sm:$0xf]
        %v322 = vld [vmem:[%s254 + $0x58] sm:$0xf]
        %v323 = vld [vmem:[%s254 + $0x5c] sm:$0xf]
        %v324 = vld [vmem:[%s254 + $0x60] sm:$0xf]
        %v325 = vld [vmem:[%s254 + $0x64] sm:$0xf]
        %v326 = vld [vmem:[%s254 + $0x68] sm:$0xf]
        %v327 = vld [vmem:[%s254 + $0x6c] sm:$0xf]
        %v328 = vld [vmem:[%s254 + $0x70] sm:$0xf]
        %v329 = vld [vmem:[%s254 + $0x74] sm:$0xf]
        %v330 = vld [vmem:[%s254 + $0x78] sm:$0xf]
        %v331 = vld [vmem:[%s254 + $0x7c] sm:$0xf]
        %v332 = vld [vmem:[#allocation5] sm:$0xf]
        %v333 = vld [vmem:[#allocation5 + $0x4] sm:$0xf]
        %v334 = vld [vmem:[#allocation5 + $0x8] sm:$0xf]
        %v335 = vld [vmem:[#allocation5 + $0xc] sm:$0xf]
        %v336 = vld [vmem:[#allocation5 + $0x10] sm:$0xf]
        %v337 = vld [vmem:[#allocation5 + $0x14] sm:$0xf]
        %v338 = vld [vmem:[#allocation5 + $0x18] sm:$0xf]
        %v339 = vld [vmem:[#allocation5 + $0x1c] sm:$0xf]
        %v340 = vld [vmem:[#allocation5 + $0x20] sm:$0xf]
        %v341 = vld [vmem:[#allocation5 + $0x24] sm:$0xf]
        %v342 = vld [vmem:[#allocation5 + $0x28] sm:$0xf]
        %v343 = vld [vmem:[#allocation5 + $0x2c] sm:$0xf]
        %v344 = vld [vmem:[#allocation5 + $0x30] sm:$0xf]
        %v345 = vld [vmem:[#allocation5 + $0x34] sm:$0xf]
        %v346 = vld [vmem:[#allocation5 + $0x38] sm:$0xf]
        %v347 = vld [vmem:[#allocation5 + $0x3c] sm:$0xf]
        %v348 = vld [vmem:[#allocation7] sm:$0x1]
        %v350 = vlaneseq
        %v351 = vshrl.u32 %v350, 7
        %v352 = vsub.s32 0, %v351
        %v353 = vrot.slane %v348, %v352
        %v387 = vunpack.c.l.b16 %v300
        %v388 = vunpack.c.l.b16 %v301
        %v389 = vunpack.c.l.b16 %v302
        %v390 = vunpack.c.l.b16 %v303
        %v391 = vunpack.c.l.b16 %v304
        %v392 = vunpack.c.l.b16 %v305
        %v393 = vunpack.c.l.b16 %v306
        %v394 = vunpack.c.l.b16 %v307
        %v395 = vunpack.c.l.b16 %v308
        %v396 = vunpack.c.l.b16 %v309
        %v397 = vunpack.c.l.b16 %v310
        %v398 = vunpack.c.l.b16 %v311
        %v399 = vunpack.c.l.b16 %v312
        %v400 = vunpack.c.l.b16 %v313
        %v401 = vunpack.c.l.b16 %v314
        %v402 = vunpack.c.l.b16 %v315
        %v403 = vunpack.c.l.b16 %v316
        %v404 = vunpack.c.l.b16 %v317
        %v405 = vunpack.c.l.b16 %v318
        %v406 = vunpack.c.l.b16 %v319
        %v407 = vunpack.c.l.b16 %v320
        %v408 = vunpack.c.l.b16 %v321
        %v409 = vunpack.c.l.b16 %v322
        %v410 = vunpack.c.l.b16 %v323
        %v411 = vunpack.c.l.b16 %v324
        %v412 = vunpack.c.l.b16 %v325
        %v413 = vunpack.c.l.b16 %v326
        %v414 = vunpack.c.l.b16 %v327
        %v415 = vunpack.c.l.b16 %v328
        %v416 = vunpack.c.l.b16 %v329
        %v417 = vunpack.c.l.b16 %v330
        %v418 = vunpack.c.l.b16 %v331
        %v419 = vpack.c.b16 %v388, %v387
        %v420 = vpack.c.b16 %v390, %v389
        %v421 = vpack.c.b16 %v392, %v391
        %v422 = vpack.c.b16 %v394, %v393
        %v423 = vpack.c.b16 %v396, %v395
        %v424 = vpack.c.b16 %v398, %v397
        %v425 = vpack.c.b16 %v400, %v399
        %v426 = vpack.c.b16 %v402, %v401
        %v427 = vpack.c.b16 %v404, %v403
        %v428 = vpack.c.b16 %v406, %v405
        %v429 = vpack.c.b16 %v408, %v407
        %v430 = vpack.c.b16 %v410, %v409
        %v431 = vpack.c.b16 %v412, %v411
        %v432 = vpack.c.b16 %v414, %v413
        %v433 = vpack.c.b16 %v416, %v415
        %v434 = vpack.c.b16 %v418, %v417
        %v467 = vunpack.c.l.b16 %v332
        %v468 = vunpack.c.l.b16 %v333
        %v469 = vunpack.c.l.b16 %v334
        %v470 = vunpack.c.l.b16 %v335
        %v471 = vunpack.c.l.b16 %v336
        %v472 = vunpack.c.l.b16 %v337
        %v473 = vunpack.c.l.b16 %v338
        %v474 = vunpack.c.l.b16 %v339
        %v475 = vunpack.c.l.b16 %v340
        %v476 = vunpack.c.l.b16 %v341
        %v477 = vunpack.c.l.b16 %v342
        %v478 = vunpack.c.l.b16 %v343
        %v479 = vunpack.c.l.b16 %v344
        %v480 = vunpack.c.l.b16 %v345
        %v481 = vunpack.c.l.b16 %v346
        %v482 = vunpack.c.l.b16 %v347
        %v483 = vpack.c.b16 %v468, %v467
        %v484 = vpack.c.b16 %v470, %v469
        %v485 = vpack.c.b16 %v472, %v471
        %v486 = vpack.c.b16 %v474, %v473
        %v487 = vpack.c.b16 %v476, %v475
        %v488 = vpack.c.b16 %v478, %v477
        %v489 = vpack.c.b16 %v480, %v479
        %v490 = vpack.c.b16 %v482, %v481
        %499 = vmatprep.subr.bf16.mxu0 0
        %500 = vmatpush1.bf16.msra.mxu0 %v483
        %501 = vmatprep.subr.bf16.mxu0 0
        %502 = vmatpush1.bf16.msra.mxu0 %v484
        %503 = vmatprep.subr.bf16.mxu0 0
        %504 = vmatpush1.bf16.msra.mxu0 %v485
        %505 = vmatprep.subr.bf16.mxu0 0
        %506 = vmatpush1.bf16.msra.mxu0 %v486
        %507 = vmatprep.subr.bf16.mxu0 0
        %508 = vmatpush1.bf16.msra.mxu0 %v487
        %509 = vmatprep.subr.bf16.mxu0 0
        %510 = vmatpush1.bf16.msra.mxu0 %v488
        %511 = vmatprep.subr.bf16.mxu0 0
        %512 = vmatpush1.bf16.msra.mxu0 %v489
        %513 = vmatprep.subr.bf16.mxu0 0
        %514 = vmatpush1.bf16.msra.mxu0 %v490
        %515 = vmatprep.subr.bf16.mxu0 0
        %516 = vmatpush1.bf16.msra.mxu0 0
        %517 = vmatprep.subr.bf16.mxu0 0
        %518 = vmatpush1.bf16.msra.mxu0 0
        %519 = vmatprep.subr.bf16.mxu0 0
        %520 = vmatpush1.bf16.msra.mxu0 0
        %521 = vmatprep.subr.bf16.mxu0 0
        %522 = vmatpush1.bf16.msra.mxu0 0
        %523 = vmatprep.subr.bf16.mxu0 0
        %524 = vmatpush1.bf16.msra.mxu0 0
        %525 = vmatprep.subr.bf16.mxu0 0
        %526 = vmatpush1.bf16.msra.mxu0 0
        %527 = vmatprep.subr.bf16.mxu0 0
        %528 = vmatpush1.bf16.msra.mxu0 0
        %529 = vmatprep.subr.bf16.mxu0 0
        %530 = vmatpush1.bf16.msra.mxu0 0
        %531 = vmatprep.mubr.bf16.mxu0 0
        %532 = vmatmul.mubr.bf16.gmra.mrb[0].mxu0 %v419
        %v533 = vpop.f32.mrb[0].mxu0
        %v534 = vadd.f32 %v353, %v533
        %v535 = vpop.f32.mrb[0].mxu0
        %v536 = vpop.f32.mrb[0].mxu0
        %v537 = vadd.f32 %v353, %v536
        %v538 = vpop.f32.mrb[0].mxu0
        %539 = vmatprep.mubr.bf16.mxu0 0
        %540 = vmatmul.mubr.bf16.gmra.mrb[0].mxu0 %v420
        %v541 = vpop.f32.mrb[0].mxu0
        %v542 = vadd.f32 %v353, %v541
        %v543 = vpop.f32.mrb[0].mxu0
        %v544 = vpop.f32.mrb[0].mxu0
        %v545 = vadd.f32 %v353, %v544
        %v546 = vpop.f32.mrb[0].mxu0
        %547 = vmatprep.mubr.bf16.mxu0 0
        %548 = vmatmul.mubr.bf16.gmra.mrb[0].mxu0 %v421
        %v549 = vpop.f32.mrb[0].mxu0
        %v550 = vadd.f32 %v353, %v549
        %v551 = vpop.f32.mrb[0].mxu0
        %v552 = vpop.f32.mrb[0].mxu0
        %v553 = vadd.f32 %v353, %v552
        %v554 = vpop.f32.mrb[0].mxu0
        %555 = vmatprep.mubr.bf16.mxu0 0
        %556 = vmatmul.mubr.bf16.gmra.mrb[0].mxu0 %v422
        %v557 = vpop.f32.mrb[0].mxu0
        %v558 = vadd.f32 %v353, %v557
        %v559 = vpop.f32.mrb[0].mxu0
        %v560 = vpop.f32.mrb[0].mxu0
        %v561 = vadd.f32 %v353, %v560
        %v562 = vpop.f32.mrb[0].mxu0
        %563 = vmatprep.mubr.bf16.mxu0 0
        %564 = vmatmul.mubr.bf16.gmra.mrb[0].mxu0 %v423
        %v565 = vpop.f32.mrb[0].mxu0
        %v566 = vadd.f32 %v353, %v565
        %v567 = vpop.f32.mrb[0].mxu0
        %v568 = vpop.f32.mrb[0].mxu0
        %v569 = vadd.f32 %v353, %v568
        %v570 = vpop.f32.mrb[0].mxu0
        %571 = vmatprep.mubr.bf16.mxu0 0
        %572 = vmatmul.mubr.bf16.gmra.mrb[0].mxu0 %v424
        %v573 = vpop.f32.mrb[0].mxu0
        %v574 = vadd.f32 %v353, %v573
        %v575 = vpop.f32.mrb[0].mxu0
        %v576 = vpop.f32.mrb[0].mxu0
        %v577 = vadd.f32 %v353, %v576
        %v578 = vpop.f32.mrb[0].mxu0
        %579 = vmatprep.mubr.bf16.mxu0 0
        %580 = vmatmul.mubr.bf16.gmra.mrb[0].mxu0 %v425
        %v581 = vpop.f32.mrb[0].mxu0
        %v582 = vadd.f32 %v353, %v581
        %v583 = vpop.f32.mrb[0].mxu0
        %v584 = vpop.f32.mrb[0].mxu0
        %v585 = vadd.f32 %v353, %v584
        %v586 = vpop.f32.mrb[0].mxu0
        %587 = vmatprep.mubr.bf16.mxu0 0
        %588 = vmatmul.mubr.bf16.gmra.mrb[0].mxu0 %v426
        %v589 = vpop.f32.mrb[0].mxu0
        %v590 = vadd.f32 %v353, %v589
        %v591 = vpop.f32.mrb[0].mxu0
        %v592 = vpop.f32.mrb[0].mxu0
        %v593 = vadd.f32 %v353, %v592
        %v594 = vpop.f32.mrb[0].mxu0
        %595 = vmatprep.mubr.bf16.mxu0 0
        %596 = vmatmul.mubr.bf16.gmra.mrb[0].mxu0 %v427
        %v597 = vpop.f32.mrb[0].mxu0
        %v598 = vadd.f32 %v353, %v597
        %v599 = vpop.f32.mrb[0].mxu0
        %v600 = vpop.f32.mrb[0].mxu0
        %v601 = vadd.f32 %v353, %v600
        %v602 = vpop.f32.mrb[0].mxu0
        %603 = vmatprep.mubr.bf16.mxu0 0
        %604 = vmatmul.mubr.bf16.gmra.mrb[0].mxu0 %v428
        %v605 = vpop.f32.mrb[0].mxu0
        %v606 = vadd.f32 %v353, %v605
        %v607 = vpop.f32.mrb[0].mxu0
        %v608 = vpop.f32.mrb[0].mxu0
        %v609 = vadd.f32 %v353, %v608
        %v610 = vpop.f32.mrb[0].mxu0
        %611 = vmatprep.mubr.bf16.mxu0 0
        %612 = vmatmul.mubr.bf16.gmra.mrb[0].mxu0 %v429
        %v613 = vpop.f32.mrb[0].mxu0
        %v614 = vadd.f32 %v353, %v613
        %v615 = vpop.f32.mrb[0].mxu0
        %v616 = vpop.f32.mrb[0].mxu0
        %v617 = vadd.f32 %v353, %v616
        %v618 = vpop.f32.mrb[0].mxu0
        %619 = vmatprep.mubr.bf16.mxu0 0
        %620 = vmatmul.mubr.bf16.gmra.mrb[0].mxu0 %v430
        %v621 = vpop.f32.mrb[0].mxu0
        %v622 = vadd.f32 %v353, %v621
        %v623 = vpop.f32.mrb[0].mxu0
        %v624 = vpop.f32.mrb[0].mxu0
        %v625 = vadd.f32 %v353, %v624
        %v626 = vpop.f32.mrb[0].mxu0
        %627 = vmatprep.mubr.bf16.mxu0 0
        %628 = vmatmul.mubr.bf16.gmra.mrb[0].mxu0 %v431
        %v629 = vpop.f32.mrb[0].mxu0
        %v630 = vadd.f32 %v353, %v629
        %v631 = vpop.f32.mrb[0].mxu0
        %v632 = vpop.f32.mrb[0].mxu0
        %v633 = vadd.f32 %v353, %v632
        %v634 = vpop.f32.mrb[0].mxu0
        %635 = vmatprep.mubr.bf16.mxu0 0
        %636 = vmatmul.mubr.bf16.gmra.mrb[0].mxu0 %v432
        %v637 = vpop.f32.mrb[0].mxu0
        %v638 = vadd.f32 %v353, %v637
        %v639 = vpop.f32.mrb[0].mxu0
        %v640 = vpop.f32.mrb[0].mxu0
        %v641 = vadd.f32 %v353, %v640
        %v642 = vpop.f32.mrb[0].mxu0
        %643 = vmatprep.mubr.bf16.mxu0 0
        %644 = vmatmul.mubr.bf16.gmra.mrb[0].mxu0 %v433
        %v645 = vpop.f32.mrb[0].mxu0
        %v646 = vadd.f32 %v353, %v645
        %v647 = vpop.f32.mrb[0].mxu0
        %v648 = vpop.f32.mrb[0].mxu0
        %v649 = vadd.f32 %v353, %v648
        %v650 = vpop.f32.mrb[0].mxu0
        %651 = vmatprep.mubr.bf16.mxu0 0
        %652 = vmatmul.mubr.bf16.gmra.mrb[0].mxu0 %v434
        %v653 = vpop.f32.mrb[0].mxu0
        %v654 = vadd.f32 %v353, %v653
        %v655 = vpop.f32.mrb[0].mxu0
        %v656 = vpop.f32.mrb[0].mxu0
        %v657 = vadd.f32 %v353, %v656
        %v658 = vpop.f32.mrb[0].mxu0
        %659 = vdwg.mxu0
        %v660 = vmax.f32 %v534, 0.0
        %v661 = vmax.f32 %v537, 0.0
        %v662 = vmax.f32 %v542, 0.0
        %v663 = vmax.f32 %v545, 0.0
        %v664 = vmax.f32 %v550, 0.0
        %v665 = vmax.f32 %v553, 0.0
        %v666 = vmax.f32 %v558, 0.0
        %v667 = vmax.f32 %v561, 0.0
        %v668 = vmax.f32 %v566, 0.0
        %v669 = vmax.f32 %v569, 0.0
        %v670 = vmax.f32 %v574, 0.0
        %v671 = vmax.f32 %v577, 0.0
        %v672 = vmax.f32 %v582, 0.0
        %v673 = vmax.f32 %v585, 0.0
        %v674 = vmax.f32 %v590, 0.0
        %v675 = vmax.f32 %v593, 0.0
        %v676 = vmax.f32 %v598, 0.0
        %v677 = vmax.f32 %v601, 0.0
        %v678 = vmax.f32 %v606, 0.0
        %v679 = vmax.f32 %v609, 0.0
        %v680 = vmax.f32 %v614, 0.0
        %v681 = vmax.f32 %v617, 0.0
        %v682 = vmax.f32 %v622, 0.0
        %v683 = vmax.f32 %v625, 0.0
        %v684 = vmax.f32 %v630, 0.0
        %v685 = vmax.f32 %v633, 0.0
        %v686 = vmax.f32 %v638, 0.0
        %v687 = vmax.f32 %v641, 0.0
        %v688 = vmax.f32 %v646, 0.0
        %v689 = vmax.f32 %v649, 0.0
        %v690 = vmax.f32 %v654, 0.0
        %v691 = vmax.f32 %v657, 0.0
        %v692 = vpack.c.bf16 %v661, %v660
        %v693 = vpack.c.bf16 %v663, %v662
        %v694 = vpack.c.bf16 %v665, %v664
        %v695 = vpack.c.bf16 %v667, %v666
        %v696 = vpack.c.bf16 %v669, %v668
        %v697 = vpack.c.bf16 %v671, %v670
        %v698 = vpack.c.bf16 %v673, %v672
        %v699 = vpack.c.bf16 %v675, %v674
        %v700 = vpack.c.bf16 %v677, %v676
        %v701 = vpack.c.bf16 %v679, %v678
        %v702 = vpack.c.bf16 %v681, %v680
        %v703 = vpack.c.bf16 %v683, %v682
        %v704 = vpack.c.bf16 %v685, %v684
        %v705 = vpack.c.bf16 %v687, %v686
        %v706 = vpack.c.bf16 %v689, %v688
        %v707 = vpack.c.bf16 %v691, %v690
        %v708 = vld [vmem:[#allocation8] sm:$0xf]
        %v709 = vld [vmem:[#allocation8 + $0x4] sm:$0xf]
        %v710 = vld [vmem:[#allocation8 + $0x8] sm:$0xf]
        %v711 = vld [vmem:[#allocation8 + $0xc] sm:$0xf]
        %v712 = vld [vmem:[#allocation8 + $0x10] sm:$0xf]
        %v713 = vld [vmem:[#allocation8 + $0x14] sm:$0xf]
        %v714 = vld [vmem:[#allocation8 + $0x18] sm:$0xf]
        %v715 = vld [vmem:[#allocation8 + $0x1c] sm:$0xf]
        %v716 = vld [vmem:[#allocation8 + $0x20] sm:$0xf]
        %v717 = vld [vmem:[#allocation8 + $0x24] sm:$0xf]
        %v718 = vld [vmem:[#allocation8 + $0x28] sm:$0xf]
        %v719 = vld [vmem:[#allocation8 + $0x2c] sm:$0xf]
        %v720 = vld [vmem:[#allocation8 + $0x30] sm:$0xf]
        %v721 = vld [vmem:[#allocation8 + $0x34] sm:$0xf]
        %v722 = vld [vmem:[#allocation8 + $0x38] sm:$0xf]
        %v723 = vld [vmem:[#allocation8 + $0x3c] sm:$0xf]
        %v724 = vld [vmem:[#allocation10] sm:$0x1]
        %v726 = vlaneseq
        %v727 = vshrl.u32 %v726, 7
        %v728 = vsub.s32 0, %v727
        %v729 = vrot.slane %v724, %v728
        %v747 = vunpack.c.l.b16 %v708
        %v748 = vunpack.c.l.b16 %v709
        %v749 = vunpack.c.l.b16 %v710
        %v750 = vunpack.c.l.b16 %v711
        %v751 = vunpack.c.l.b16 %v712
        %v752 = vunpack.c.l.b16 %v713
        %v753 = vunpack.c.l.b16 %v714
        %v754 = vunpack.c.l.b16 %v715
        %v755 = vunpack.c.l.b16 %v716
        %v756 = vunpack.c.l.b16 %v717
        %v757 = vunpack.c.l.b16 %v718
        %v758 = vunpack.c.l.b16 %v719
        %v759 = vunpack.c.l.b16 %v720
        %v760 = vunpack.c.l.b16 %v721
        %v761 = vunpack.c.l.b16 %v722
        %v762 = vunpack.c.l.b16 %v723
        %v763 = vpack.c.b16 %v748, %v747
        %v764 = vpack.c.b16 %v750, %v749
        %v765 = vpack.c.b16 %v752, %v751
        %v766 = vpack.c.b16 %v754, %v753
        %v767 = vpack.c.b16 %v756, %v755
        %v768 = vpack.c.b16 %v758, %v757
        %v769 = vpack.c.b16 %v760, %v759
        %v770 = vpack.c.b16 %v762, %v761
        %779 = vmatprep.subr.bf16.mxu0 0
        %780 = vmatpush1.bf16.msra.mxu0 %v763
        %781 = vmatprep.subr.bf16.mxu0 0
        %782 = vmatpush1.bf16.msra.mxu0 %v764
        %783 = vmatprep.subr.bf16.mxu0 0
        %784 = vmatpush1.bf16.msra.mxu0 %v765
        %785 = vmatprep.subr.bf16.mxu0 0
        %786 = vmatpush1.bf16.msra.mxu0 %v766
        %787 = vmatprep.subr.bf16.mxu0 0
        %788 = vmatpush1.bf16.msra.mxu0 %v767
        %789 = vmatprep.subr.bf16.mxu0 0
        %790 = vmatpush1.bf16.msra.mxu0 %v768
        %791 = vmatprep.subr.bf16.mxu0 0
        %792 = vmatpush1.bf16.msra.mxu0 %v769
        %793 = vmatprep.subr.bf16.mxu0 0
        %794 = vmatpush1.bf16.msra.mxu0 %v770
        %795 = vmatprep.subr.bf16.mxu0 0
        %796 = vmatpush1.bf16.msra.mxu0 0
        %797 = vmatprep.subr.bf16.mxu0 0
        %798 = vmatpush1.bf16.msra.mxu0 0
        %799 = vmatprep.subr.bf16.mxu0 0
        %800 = vmatpush1.bf16.msra.mxu0 0
        %801 = vmatprep.subr.bf16.mxu0 0
        %802 = vmatpush1.bf16.msra.mxu0 0
        %803 = vmatprep.subr.bf16.mxu0 0
        %804 = vmatpush1.bf16.msra.mxu0 0
        %805 = vmatprep.subr.bf16.mxu0 0
        %806 = vmatpush1.bf16.msra.mxu0 0
        %807 = vmatprep.subr.bf16.mxu0 0
        %808 = vmatpush1.bf16.msra.mxu0 0
        %809 = vmatprep.subr.bf16.mxu0 0
        %810 = vmatpush1.bf16.msra.mxu0 0
        %811 = vmatprep.mubr.bf16.mxu0 0
        %812 = vmatmul.mubr.bf16.gmra.mrb[0].mxu0 %v692
        %v813 = vpop.f32.mrb[0].mxu0
        %v814 = vadd.f32 %v729, %v813
        %v815 = vpop.f32.mrb[0].mxu0
        %v816 = vpop.f32.mrb[0].mxu0
        %v817 = vadd.f32 %v729, %v816
        %v818 = vpop.f32.mrb[0].mxu0
        %819 = vmatprep.mubr.bf16.mxu0 0
        %820 = vmatmul.mubr.bf16.gmra.mrb[0].mxu0 %v693
        %v821 = vpop.f32.mrb[0].mxu0
        %v822 = vadd.f32 %v729, %v821
        %v823 = vpop.f32.mrb[0].mxu0
        %v824 = vpop.f32.mrb[0].mxu0
        %v825 = vadd.f32 %v729, %v824
        %v826 = vpop.f32.mrb[0].mxu0
        %827 = vmatprep.mubr.bf16.mxu0 0
        %828 = vmatmul.mubr.bf16.gmra.mrb[0].mxu0 %v694
        %v829 = vpop.f32.mrb[0].mxu0
        %v830 = vadd.f32 %v729, %v829
        %v831 = vpop.f32.mrb[0].mxu0
        %v832 = vpop.f32.mrb[0].mxu0
        %v833 = vadd.f32 %v729, %v832
        %v834 = vpop.f32.mrb[0].mxu0
        %835 = vmatprep.mubr.bf16.mxu0 0
        %836 = vmatmul.mubr.bf16.gmra.mrb[0].mxu0 %v695
        %v837 = vpop.f32.mrb[0].mxu0
        %v838 = vadd.f32 %v729, %v837
        %v839 = vpop.f32.mrb[0].mxu0
        %v840 = vpop.f32.mrb[0].mxu0
        %v841 = vadd.f32 %v729, %v840
        %v842 = vpop.f32.mrb[0].mxu0
        %843 = vmatprep.mubr.bf16.mxu0 0
        %844 = vmatmul.mubr.bf16.gmra.mrb[0].mxu0 %v696
        %v845 = vpop.f32.mrb[0].mxu0
        %v846 = vadd.f32 %v729, %v845
        %v847 = vpop.f32.mrb[0].mxu0
        %v848 = vpop.f32.mrb[0].mxu0
        %v849 = vadd.f32 %v729, %v848
        %v850 = vpop.f32.mrb[0].mxu0
        %851 = vmatprep.mubr.bf16.mxu0 0
        %852 = vmatmul.mubr.bf16.gmra.mrb[0].mxu0 %v697
        %v853 = vpop.f32.mrb[0].mxu0
        %v854 = vadd.f32 %v729, %v853
        %v855 = vpop.f32.mrb[0].mxu0
        %v856 = vpop.f32.mrb[0].mxu0
        %v857 = vadd.f32 %v729, %v856
        %v858 = vpop.f32.mrb[0].mxu0
        %859 = vmatprep.mubr.bf16.mxu0 0
        %860 = vmatmul.mubr.bf16.gmra.mrb[0].mxu0 %v698
        %v861 = vpop.f32.mrb[0].mxu0
        %v862 = vadd.f32 %v729, %v861
        %v863 = vpop.f32.mrb[0].mxu0
        %v864 = vpop.f32.mrb[0].mxu0
        %v865 = vadd.f32 %v729, %v864
        %v866 = vpop.f32.mrb[0].mxu0
        %867 = vmatprep.mubr.bf16.mxu0 0
        %868 = vmatmul.mubr.bf16.gmra.mrb[0].mxu0 %v699
        %v869 = vpop.f32.mrb[0].mxu0
        %v870 = vadd.f32 %v729, %v869
        %v871 = vpop.f32.mrb[0].mxu0
        %v872 = vpop.f32.mrb[0].mxu0
        %v873 = vadd.f32 %v729, %v872
        %v874 = vpop.f32.mrb[0].mxu0
        %875 = vmatprep.mubr.bf16.mxu0 0
        %876 = vmatmul.mubr.bf16.gmra.mrb[0].mxu0 %v700
        %v877 = vpop.f32.mrb[0].mxu0
        %v878 = vadd.f32 %v729, %v877
        %v879 = vpop.f32.mrb[0].mxu0
        %v880 = vpop.f32.mrb[0].mxu0
        %v881 = vadd.f32 %v729, %v880
        %v882 = vpop.f32.mrb[0].mxu0
        %883 = vmatprep.mubr.bf16.mxu0 0
        %884 = vmatmul.mubr.bf16.gmra.mrb[0].mxu0 %v701
        %v885 = vpop.f32.mrb[0].mxu0
        %v886 = vadd.f32 %v729, %v885
        %v887 = vpop.f32.mrb[0].mxu0
        %v888 = vpop.f32.mrb[0].mxu0
        %v889 = vadd.f32 %v729, %v888
        %v890 = vpop.f32.mrb[0].mxu0
        %891 = vmatprep.mubr.bf16.mxu0 0
        %892 = vmatmul.mubr.bf16.gmra.mrb[0].mxu0 %v702
        %v893 = vpop.f32.mrb[0].mxu0
        %v894 = vadd.f32 %v729, %v893
        %v895 = vpop.f32.mrb[0].mxu0
        %v896 = vpop.f32.mrb[0].mxu0
        %v897 = vadd.f32 %v729, %v896
        %v898 = vpop.f32.mrb[0].mxu0
        %899 = vmatprep.mubr.bf16.mxu0 0
        %900 = vmatmul.mubr.bf16.gmra.mrb[0].mxu0 %v703
        %v901 = vpop.f32.mrb[0].mxu0
        %v902 = vadd.f32 %v729, %v901
        %v903 = vpop.f32.mrb[0].mxu0
        %v904 = vpop.f32.mrb[0].mxu0
        %v905 = vadd.f32 %v729, %v904
        %v906 = vpop.f32.mrb[0].mxu0
        %907 = vmatprep.mubr.bf16.mxu0 0
        %908 = vmatmul.mubr.bf16.gmra.mrb[0].mxu0 %v704
        %v909 = vpop.f32.mrb[0].mxu0
        %v910 = vadd.f32 %v729, %v909
        %v911 = vpop.f32.mrb[0].mxu0
        %v912 = vpop.f32.mrb[0].mxu0
        %v913 = vadd.f32 %v729, %v912
        %v914 = vpop.f32.mrb[0].mxu0
        %915 = vmatprep.mubr.bf16.mxu0 0
        %916 = vmatmul.mubr.bf16.gmra.mrb[0].mxu0 %v705
        %v917 = vpop.f32.mrb[0].mxu0
        %v918 = vadd.f32 %v729, %v917
        %v919 = vpop.f32.mrb[0].mxu0
        %v920 = vpop.f32.mrb[0].mxu0
        %v921 = vadd.f32 %v729, %v920
        %v922 = vpop.f32.mrb[0].mxu0
        %923 = vmatprep.mubr.bf16.mxu0 0
        %924 = vmatmul.mubr.bf16.gmra.mrb[0].mxu0 %v706
        %v925 = vpop.f32.mrb[0].mxu0
        %v926 = vadd.f32 %v729, %v925
        %v927 = vpop.f32.mrb[0].mxu0
        %v928 = vpop.f32.mrb[0].mxu0
        %v929 = vadd.f32 %v729, %v928
        %v930 = vpop.f32.mrb[0].mxu0
        %931 = vmatprep.mubr.bf16.mxu0 0
        %932 = vmatmul.mubr.bf16.gmra.mrb[0].mxu0 %v707
        %v933 = vpop.f32.mrb[0].mxu0
        %v934 = vadd.f32 %v729, %v933
        %v935 = vpop.f32.mrb[0].mxu0
        %v936 = vpop.f32.mrb[0].mxu0
        %v937 = vadd.f32 %v729, %v936
        %v938 = vpop.f32.mrb[0].mxu0
        %939 = vdwg.mxu0
        %v940 = vmax.f32 %v814, 0.0
        %v941 = vmax.f32 %v817, 0.0
        %v942 = vmax.f32 %v822, 0.0
        %v943 = vmax.f32 %v825, 0.0
        %v944 = vmax.f32 %v830, 0.0
        %v945 = vmax.f32 %v833, 0.0
        %v946 = vmax.f32 %v838, 0.0
        %v947 = vmax.f32 %v841, 0.0
        %v948 = vmax.f32 %v846, 0.0
        %v949 = vmax.f32 %v849, 0.0
        %v950 = vmax.f32 %v854, 0.0
        %v951 = vmax.f32 %v857, 0.0
        %v952 = vmax.f32 %v862, 0.0
        %v953 = vmax.f32 %v865, 0.0
        %v954 = vmax.f32 %v870, 0.0
        %v955 = vmax.f32 %v873, 0.0
        %v956 = vmax.f32 %v878, 0.0
        %v957 = vmax.f32 %v881, 0.0
        %v958 = vmax.f32 %v886, 0.0
        %v959 = vmax.f32 %v889, 0.0
        %v960 = vmax.f32 %v894, 0.0
        %v961 = vmax.f32 %v897, 0.0
        %v962 = vmax.f32 %v902, 0.0
        %v963 = vmax.f32 %v905, 0.0
        %v964 = vmax.f32 %v910, 0.0
        %v965 = vmax.f32 %v913, 0.0
        %v966 = vmax.f32 %v918, 0.0
        %v967 = vmax.f32 %v921, 0.0
        %v968 = vmax.f32 %v926, 0.0
        %v969 = vmax.f32 %v929, 0.0
        %v970 = vmax.f32 %v934, 0.0
        %v971 = vmax.f32 %v937, 0.0
        %972 = vst [vmem:[%s296] sm:$0xff] %v940
        %973 = vst [vmem:[%s296 + $0x8] sm:$0xff] %v941
        %974 = vst [vmem:[%s296 + $0x10] sm:$0xff] %v942
        %975 = vst [vmem:[%s296 + $0x18] sm:$0xff] %v943
        %976 = vst [vmem:[%s296 + $0x20] sm:$0xff] %v944
        %977 = vst [vmem:[%s296 + $0x28] sm:$0xff] %v945
        %978 = vst [vmem:[%s296 + $0x30] sm:$0xff] %v946
        %979 = vst [vmem:[%s296 + $0x38] sm:$0xff] %v947
        %980 = vst [vmem:[%s296 + $0x40] sm:$0xff] %v948
        %981 = vst [vmem:[%s296 + $0x48] sm:$0xff] %v949
        %982 = vst [vmem:[%s296 + $0x50] sm:$0xff] %v950
        %983 = vst [vmem:[%s296 + $0x58] sm:$0xff] %v951
        %984 = vst [vmem:[%s296 + $0x60] sm:$0xff] %v952
        %985 = vst [vmem:[%s296 + $0x68] sm:$0xff] %v953
        %986 = vst [vmem:[%s296 + $0x70] sm:$0xff] %v954
        %987 = vst [vmem:[%s296 + $0x78] sm:$0xff] %v955
        %988 = vst [vmem:[%s296 + $0x80] sm:$0xff] %v956
        %989 = vst [vmem:[%s296 + $0x88] sm:$0xff] %v957
        %990 = vst [vmem:[%s296 + $0x90] sm:$0xff] %v958
        %991 = vst [vmem:[%s296 + $0x98] sm:$0xff] %v959
        %992 = vst [vmem:[%s296 + $0xa0] sm:$0xff] %v960
        %993 = vst [vmem:[%s296 + $0xa8] sm:$0xff] %v961
        %994 = vst [vmem:[%s296 + $0xb0] sm:$0xff] %v962
        %995 = vst [vmem:[%s296 + $0xb8] sm:$0xff] %v963
        %996 = vst [vmem:[%s296 + $0xc0] sm:$0xff] %v964
        %997 = vst [vmem:[%s296 + $0xc8] sm:$0xff] %v965
        %998 = vst [vmem:[%s296 + $0xd0] sm:$0xff] %v966
        %999 = vst [vmem:[%s296 + $0xd8] sm:$0xff] %v967
        %1000 = vst [vmem:[%s296 + $0xe0] sm:$0xff] %v968
        %1001 = vst [vmem:[%s296 + $0xe8] sm:$0xff] %v969
        %1002 = vst [vmem:[%s296 + $0xf0] sm:$0xff] %v970
        %1003 = vst [vmem:[%s296 + $0xf8] sm:$0xff] %v971
        %s1004 = sand.u32 %s142, 1
        %s1005 = scalar_lea.sflag [#allocation4], %s1004
        %s1006 = sand.u32 %s142, 1
        %s1007 = smul.addr %s1006, 256
        %s1008 = scalar_lea.vmem [#allocation11], %s1007
        // Predicated region
        $region61: #{tpu_custom_call.1} parent=39 // pred_check
          %p1009 = pneg %p152
        $region62: #{tpu_custom_call.1} parent=39 // pred_check_branch
          %1011 = sbr.rel (%p1009) target = $region64
        $region63: #{tpu_custom_call.1} parent=39 // pred_region
          %s1012 = smul.u32 32, %s24
          %s1014 = ssub.s32 4096, 4096
          %1015 = vsyncadd %s1005, %s1014
          %s1016 = smul.addr %s1012, 128
          %s1017 = scalar_lea.hbm %s5, %s1016
          %s1018 = sshll.u32 %s1008, 4
          %s1019 = int_to_ptr.vmem [resolvable:$true] %s1018
          %1024 = dma.vmem_to_hbm [thread:$0]  %s1019, 4096, %s1017, %s1005, 128, 128, 8
        $region64: #{tpu_custom_call.1} parent=39 // pred_fallthru
          _
      $region40: #{tpu_custom_call.1} parent=5 // pred_fallthru
        _
      %p1025 = scmp.le.s32.totalorder 2, %s19
      // Predicated region
      $region65: #{tpu_custom_call.1} parent=5 // pred_check
        %p1026 = pneg %p1025
      $region66: #{tpu_custom_call.1} parent=5 // pred_check_branch
        %1028 = sbr.rel (%p1026) target = $region68
      $region67: #{tpu_custom_call.1} parent=5 // pred_region
        %s1029 = ssub.s32 %s19, 2
        // Predicated region
        $region69: #{tpu_custom_call.1} parent=67 // pred_check
          %p1030 = pneg %p158
        $region70: #{tpu_custom_call.1} parent=67 // pred_check_branch
          %1032 = sbr.rel (%p1030) target = $region72
        $region71: #{tpu_custom_call.1} parent=67 // pred_region
          %s1033 = sand.u32 %s143, 1
          %s1034 = scalar_lea.sflag [#allocation4], %s1033
          %s1035 = sand.u32 %s143, 1
          %s1036 = smul.addr %s1035, 256
          %s1037 = scalar_lea.vmem [#allocation11], %s1036
          %1038 = dma.done %s1034, 4096
        $region72: #{tpu_custom_call.1} parent=67 // pred_fallthru
          _
      $region68: #{tpu_custom_call.1} parent=5 // pred_fallthru
        _
    $region6: #{tpu_custom_call.1} parent=1 // loop_footer
      %s23 = sadd.s32 1, %s19
    $region7: #{tpu_custom_call.1} parent=1 // loop_footer_branch
      %18 = sbr.rel target = $region3
    $region8: #{tpu_custom_call.1} parent=1 // loop_exit
      _
    %1039 = vsyncpa [#allocation3], 1
    %s1040 = scalar_lea.sflag [#allocation3], 1
    %1041 = vsyncpa %s1040, 1
    %1042 = vsyncpa [#allocation6], 1
    %1043 = vsyncpa [#allocation9], 1
    %1044 = vsyncpa [#allocation4], 1
    %s1045 = scalar_lea.sflag [#allocation4], 1
    %1046 = vsyncpa %s1045, 1

</llo_original>
